<compile_context>
chip_gen: v6e
topology: v6e:2x2x1
jax: 0.10.0
libtpu: 0.0.40
codegen_flags: <defaults>
</compile_context>

<pallas_src>
import jax
import jax.numpy as jnp
from jax.experimental import pallas as pl
from jax.experimental.pallas import tpu as pltpu

_LANE = 128
_MAX_COLS = 1024               # lane-dense slab width (multiple of 128)
_TARGET_TILE_BYTES = 4 << 20   # ~4 MiB tile: amortizes ~0.35 us/step overhead;
                               # in+out double buffers = 16 MiB < 32 MiB limit.
_VMEM_LIMIT_BYTES = 32 << 20   # safe on v5e (128 MiB phys), v6e (128), v7x (64)


def _identity_copy_kernel(x_ref, o_ref):
    # Pure pass-through on the current VMEM tile.
    o_ref[...] = x_ref[...]


def _sublane_multiple(itemsize):
    # Sub-32-bit dtypes pack along sublanes: f32 -> 8, bf16/f16 -> 16, i8/fp8 -> 32.
    return {4: 8, 2: 16, 1: 32}.get(itemsize, 8)


def _pick_block_rows(rows, cols, itemsize, sub):
    """Largest divisor-of-rows block (multiple of `sub`) within the byte budget,
    while keeping the parallel grid at >= 2 steps when rows allow (v7x megacore)."""
    if rows <= sub:
        return rows  # single block equal to full array dims (always legal)
    target = max(sub, _TARGET_TILE_BYTES // (cols * itemsize))
    if rows >= 2 * sub:
        # Don't let one huge block collapse the grid to a single step.
        target = min(target, max(sub, ((rows // 2) // sub) * sub))
    target = min(target, rows)
    target = max(sub, (target // sub) * sub)
    cand = target
    while cand >= sub:
        if rows % cand == 0:
            return cand            # exact divisor: no ragged/masked tail tile
        cand -= sub
    return target                  # fallback: Pallas masks the ragged tail


def _pallas_identity_copy_impl(x):
    n = x.size
    if n == 0:
        return x

    itemsize = x.dtype.itemsize
    sub = _sublane_multiple(itemsize)

    if n % _LANE == 0:
        # Widest lane dim (multiple of 128) dividing n, capped at _MAX_COLS.
        cols = _LANE
        while cols * 2 <= _MAX_COLS and n % (cols * 2) == 0:
            cols *= 2
        rows = n // cols
        block_rows = _pick_block_rows(rows, cols, itemsize, sub)
    else:
        # Odd flat size: single block equal to the full (1, n) array (legal block).
        rows, cols = 1, n
        block_rows = 1

    x2d = x.reshape(rows, cols)   # contiguous fold: bitcast under jit, no copy
    grid = (pl.cdiv(rows, block_rows),)

    out2d = pl.pallas_call(
        _identity_copy_kernel,
        out_shape=jax.ShapeDtypeStruct((rows, cols), x2d.dtype),
        grid_spec=pltpu.PrefetchScalarGridSpec(
            num_scalar_prefetch=0,
            grid=grid,
            in_specs=[pl.BlockSpec((block_rows, cols), lambda i: (i, 0))],
            out_specs=pl.BlockSpec((block_rows, cols), lambda i: (i, 0)),
        ),
        compiler_params=pltpu.CompilerParams(
            dimension_semantics=("parallel",),
            vmem_limit_bytes=_VMEM_LIMIT_BYTES,
        ),
    )(x2d)
    return out2d.reshape(x.shape)


_pallas_identity_copy = jax.jit(_pallas_identity_copy_impl)


def debug_layer(x):
    """Pallas equivalent of DebugLayer.forward: print(x.shape); return x.

    Identity => no device work at all (per perf review)."""
    print(tuple(x.shape))
    return x


def debug_layer_copy(x):
    """Opt-in path: same host-side print, but returns a FRESH buffer produced by
    the Pallas lane-dense copy kernel (kept as the kernel/benchmark path)."""
    print(tuple(x.shape))
    return _pallas_identity_copy(x)


if __name__ == "__main__":
    import numpy as np

    key = jax.random.PRNGKey(0)
    # Small NCHW input consistent with a conv-style feature map.
    x = jax.random.normal(key, (2, 4, 16, 16), dtype=jnp.float32)

    # Default path: pure identity, zero device work.
    y = jax.block_until_ready(debug_layer(x))
    assert y.shape == x.shape and y.dtype == x.dtype
    assert bool(jnp.all(y == x))

    # Pallas copy path (single-block case: rows < sublane multiple).
    yc = jax.block_until_ready(debug_layer_copy(x))
    assert yc.shape == x.shape and yc.dtype == x.dtype
    assert np.array_equal(np.asarray(yc), np.asarray(x))

    # Pallas copy path with a multi-step "parallel" grid (rows=32 -> 2 tiles),
    # exercising divisor block_rows and megacore-friendly tiling, in bf16.
    x2 = jax.random.normal(jax.random.PRNGKey(1), (8, 4, 16, 16), dtype=jnp.bfloat16)
    y2 = jax.block_until_ready(debug_layer_copy(x2))
    assert y2.shape == x2.shape and y2.dtype == jnp.bfloat16
    assert np.array_equal(np.asarray(y2, dtype=np.float32),
                          np.asarray(x2, dtype=np.float32))

    print("KERNEL_OK")
</pallas_src>

<mosaic_0001>
module attributes {stable_mosaic.version = 11 : i64} {
  func.func @_identity_copy_kernel(%arg0: i32, %arg1: memref<2x1024xf32, #tpu.memory_space<vmem>>, %arg2: memref<2x1024xf32, #tpu.memory_space<vmem>>) attributes {dimension_semantics = [#tpu.dimension_semantics<parallel>], iteration_bounds = array<i64: 1>, scalar_prefetch = 0 : i64, scratch_operands = 0 : i64, tpu.core_type = #tpu.core_type<tc>, window_params = [{transform_indices = @transform_0, window_bounds = array<i64: 2, 1024>}, {transform_indices = @transform_1, window_bounds = array<i64: 2, 1024>}]} {
    %c0 = arith.constant 0 : index
    %c0_0 = arith.constant 0 : index
    %0 = vector.load %arg1[%c0, %c0_0] : memref<2x1024xf32, #tpu.memory_space<vmem>>, vector<2x1024xf32>
    %c0_1 = arith.constant 0 : index
    %c0_2 = arith.constant 0 : index
    %1 = vector.load %arg2[%c0_1, %c0_2] : memref<2x1024xf32, #tpu.memory_space<vmem>>, vector<2x1024xf32>
    tpu.vector_store %arg2[%c0_1, %c0_2], %0 {strides = array<i32>} : memref<2x1024xf32, #tpu.memory_space<vmem>>, vector<2x1024xf32>,
    return
  }
  func.func @transform_0(%arg0: i32) -> (i32, i32) {
    %c0_i32 = arith.constant 0 : i32
    %c0_i32_0 = arith.constant 0 : i32
    return %arg0, %c0_i32 : i32, i32
  }
  func.func @transform_1(%arg0: i32) -> (i32, i32) {
    %c0_i32 = arith.constant 0 : i32
    %c0_i32_0 = arith.constant 0 : i32
    return %arg0, %c0_i32 : i32, i32
  }
}

</mosaic_0001>

<llo_original>
// kernel: _pallas_identity_copy_impl.1
$region0: #{_pallas_identity_copy_impl.1}
  #allocation0 [shape = 'u32[]', space=smem, size = 0x4, offset = 0x4, fixed_abs, tag = 'smem constant byte address 0x4 - core index']
  #allocation1 [shape = 'u32[144,128]{1,0:T(1,128)}', space=vmem, size = 0x12000, scoped, tag = 'internal scratch']
  %s0 = inlined_call_operand.vmem [shape: f32[2,1024], index: 0, kind: input, shape index: {}]
  %s1 = inlined_call_operand.vmem [shape: f32[2,1024], index: 1, kind: output, shape index: {}]
  %s2 = sld [smem:[#allocation0]]
  $region14: #{_pallas_identity_copy_impl.1} parent=0
    _
  %s4 = ssub.s32 1, %s2
  %s5 = scalar_select 0, %s4, %s2
  // Predicated region
  $region2: #{_pallas_identity_copy_impl.1} parent=0 // pred_check
    _
  $region3: #{_pallas_identity_copy_impl.1} parent=0 // pred_check_branch
    %7 = sbr.rel (0) target = $region5
  $region4: #{_pallas_identity_copy_impl.1} parent=0 // pred_region
    _
  $region5: #{_pallas_identity_copy_impl.1} parent=0 // pred_fallthru
    _
  %v8 = vld [vmem:[%s0] sm:$0xff]
  %v9 = vld [vmem:[%s0 + $0x8] sm:$0xff]
  %10 = vst [vmem:[%s1] sm:$0xff] %v8
  %11 = vst [vmem:[%s1 + $0x8] sm:$0xff] %v9
  // Predicated region
  $region6: #{_pallas_identity_copy_impl.1} parent=0 // pred_check
    _
  $region7: #{_pallas_identity_copy_impl.1} parent=0 // pred_check_branch
    %13 = sbr.rel (0) target = $region9
  $region8: #{_pallas_identity_copy_impl.1} parent=0 // pred_region
    _
  $region9: #{_pallas_identity_copy_impl.1} parent=0 // pred_fallthru
    _
  // Predicated region
  $region10: #{_pallas_identity_copy_impl.1} parent=0 // pred_check
    _
  $region11: #{_pallas_identity_copy_impl.1} parent=0 // pred_check_branch
    %15 = sbr.rel (0) target = $region13
  $region12: #{_pallas_identity_copy_impl.1} parent=0 // pred_region
    _
  $region13: #{_pallas_identity_copy_impl.1} parent=0 // pred_fallthru
    _

</llo_original>
